<compile_context>
chip_gen: v7x
topology: tpu7x:2x2x1
jax: 0.10.0
libtpu: 0.0.40
codegen_flags: <defaults>
</compile_context>

<pallas_src>
import jax
import jax.numpy as jnp
from jax.experimental import pallas as pl
from jax.experimental.pallas import tpu as pltpu

HIDDEN_DIM = 16
_SMALL_BATCH_BYPASS = 4096


def _round_up(x: int, m: int) -> int:
    return (x + m - 1) // m * m


def _default_block_b() -> int:
    """Rows per grid step.  Input tile bytes = 64*tb (f32): big enough to
    amortize the ~0.35us per-grid-step overhead, small enough that the
    double-buffered footprint fits every generation's VMEM."""
    try:
        kind = jax.devices()[0].device_kind.lower()
    except Exception:
        return 64 * 1024
    if "v6" in kind or "7" in kind:        # v6e / v7x
        return 128 * 1024                  # 8 MiB/tile f32, ~17 MiB double-buffered
    return 64 * 1024                       # v5e and older: 4 MiB/tile


def _grid_semantics(core_parallel):
    """Batch tiles are independent.  On v7x (2 TensorCores/chip) use
    CORE_PARALLEL so the grid is really sharded across cores; plain
    "parallel" elsewhere (megacore sharding on v4/v5p, no-op on v5e/v6e)."""
    if core_parallel is None:
        try:
            kind = jax.devices()[0].device_kind.lower()
            core_parallel = ("7" in kind) and hasattr(pltpu, "CORE_PARALLEL")
        except Exception:
            core_parallel = False
    if core_parallel:
        return (pltpu.CORE_PARALLEL,)
    return ("parallel",)


def _secondnet_kernel(xt_ref, w_ref, b_ref, o_ref):
    # xt_ref: (H, TB) VMEM (f32 or bf16) -- features on sublanes, batch on lanes.
    # w_ref : (H, 1)  f32 VMEM column (constant across the grid).
    # b_ref : (1,)    f32 SMEM scalar.
    # o_ref : (1, TB) f32 VMEM lane-dense output slab.
    xt = xt_ref[...].astype(jnp.float32)            # one dense tile load (+ upcast if bf16)
    prod = xt * w_ref[...]                          # dense (H, TB) VPU multiply
    z = jnp.sum(prod, axis=0, keepdims=True) + b_ref[0]   # XLU cross-sublane reduce
    # sigmoid(z) = 1 / (1 + exp(-z)); exp runs on the otherwise idle EUP slot,
    # exact reciprocal is free for this HBM-bound kernel.
    o_ref[...] = (1.0 / (1.0 + jnp.exp(-z))).astype(o_ref.dtype)


def secondnet_forward(x, w, b, *, block_b=None, force_kernel=False, core_parallel=None):
    """SecondNet forward: sigmoid(x @ w + b).

    x: (B, H) f32/bf16, w: (H, 1), b: (1, 1) or (1,)  ->  (B, 1) f32.
    """
    B, H = x.shape
    assert H == HIDDEN_DIM

    w_col = jnp.reshape(w, (HIDDEN_DIM, 1)).astype(jnp.float32)
    b_s = jnp.reshape(b, (1,)).astype(jnp.float32)

    # Small-batch bypass: launch + per-step overhead dominates tiny batches;
    # the XLA-fused path is strictly faster there on every generation.
    if not force_kernel and B < _SMALL_BATCH_BYPASS:
        return jax.nn.sigmoid(x.astype(jnp.float32) @ w_col + b_s)

    # Keep bf16 inputs in bf16 on the HBM stream (halves the dominant traffic);
    # anything else is streamed as f32.  Upcast to f32 happens inside the kernel.
    if x.dtype not in (jnp.bfloat16, jnp.float32):
        x = x.astype(jnp.float32)

    if block_b is None:
        block_b = _default_block_b()

    bp = _round_up(B, 128)                       # lane-aligned batch extent
    tb = min(_round_up(block_b, 128), bp)        # rows per grid step
    num_tiles = pl.cdiv(bp, tb)                  # ragged last block handled by Pallas

    # Present x transposed: 16 features on sublanes, batch on the 128-wide lanes.
    # TODO(synk): ideally the producer emits x feature-major (H, B) so this
    # single extra HBM read+write pass over x disappears entirely.
    x_t = jnp.transpose(x)                       # (H, B)
    if bp != B:                                  # only when B is not 128-aligned
        x_t = jnp.pad(x_t, ((0, 0), (0, bp - B)))

    itemsize = jnp.dtype(x_t.dtype).itemsize
    tile_bytes = HIDDEN_DIM * tb * itemsize + 4 * tb          # input + output tile
    vmem_limit = int(min(48 << 20, max(32 << 20, 2 * tile_bytes + (8 << 20))))

    out = pl.pallas_call(
        _secondnet_kernel,
        out_shape=jax.ShapeDtypeStruct((1, bp), jnp.float32),
        grid=(num_tiles,),
        in_specs=[
            pl.BlockSpec((HIDDEN_DIM, tb), lambda i: (0, i)),      # x^T tile (lane-dense)
            pl.BlockSpec((HIDDEN_DIM, 1), lambda i: (0, 0)),       # w column (constant)
            pl.BlockSpec(memory_space=pltpu.MemorySpace.SMEM),     # bias scalar
        ],
        out_specs=pl.BlockSpec((1, tb), lambda i: (0, i)),
        compiler_params=pltpu.CompilerParams(
            dimension_semantics=_grid_semantics(core_parallel),
            vmem_limit_bytes=vmem_limit,
        ),
    )(x_t, w_col, b_s)

    return jnp.reshape(out[:, :B], (B, 1))


def init_params(key):
    # Mirrors nn.Linear(16, 1) default init: U(-1/sqrt(fan_in), 1/sqrt(fan_in)).
    k_w, k_b = jax.random.split(key)
    bound = 1.0 / jnp.sqrt(jnp.array(HIDDEN_DIM, jnp.float32))
    # PyTorch stores weight as (out, in) = (1, 16); we keep its transpose (16, 1).
    w = jax.random.uniform(k_w, (HIDDEN_DIM, 1), jnp.float32, -bound, bound)
    b = jax.random.uniform(k_b, (1, 1), jnp.float32, -bound, bound)
    return w, b


if __name__ == "__main__":
    key = jax.random.PRNGKey(0)
    k_x, k_p = jax.random.split(key)
    w, b = init_params(k_p)

    # Small demo shape consistent with the module (batch=8, hidden=16); force
    # the kernel path (the bypass would otherwise route tiny batches to XLA).
    batch = 8
    x = jax.random.normal(k_x, (batch, HIDDEN_DIM), jnp.float32)
    out = secondnet_forward(x, w, b, force_kernel=True)
    jax.block_until_ready(out)
    ref = jax.nn.sigmoid(x @ w + b)
    assert out.shape == (batch, 1)
    assert jnp.allclose(out, ref, atol=1e-4, rtol=1e-4)

    # Multi-tile path: 3 grid steps; 2304 exercises a ragged (128-aligned) last
    # block, 2309 additionally exercises the non-128-multiple padding path.
    for batch2 in (2304, 2309):
        x2 = jax.random.normal(k_x, (batch2, HIDDEN_DIM), jnp.float32)
        out2 = secondnet_forward(x2, w, b, force_kernel=True, block_b=1024)
        jax.block_until_ready(out2)
        ref2 = jax.nn.sigmoid(x2 @ w + b)
        assert out2.shape == (batch2, 1)
        assert jnp.allclose(out2, ref2, atol=1e-4, rtol=1e-4)

    # bf16 input path (halved HBM traffic); reference on the bf16-rounded input.
    x3 = jax.random.normal(k_x, (512, HIDDEN_DIM), jnp.float32).astype(jnp.bfloat16)
    out3 = secondnet_forward(x3, w, b, force_kernel=True)
    jax.block_until_ready(out3)
    ref3 = jax.nn.sigmoid(x3.astype(jnp.float32) @ w + b)
    assert out3.shape == (512, 1)
    assert jnp.allclose(out3, ref3, atol=1e-4, rtol=1e-4)

    print("KERNEL_OK")
</pallas_src>

<mosaic_0001>
module attributes {stable_mosaic.version = 11 : i64} {
  func.func @_secondnet_kernel(%arg0: i32, %arg1: memref<16x128xf32, #tpu.memory_space<vmem>>, %arg2: memref<16x1xf32, #tpu.memory_space<vmem>>, %arg3: memref<1xf32, #tpu.memory_space<smem>>, %arg4: memref<1x128xf32, #tpu.memory_space<vmem>>) attributes {dimension_semantics = [#tpu.dimension_semantics<parallel>], iteration_bounds = array<i64: 1>, scalar_prefetch = 0 : i64, scratch_operands = 0 : i64, tpu.core_type = #tpu.core_type<tc>, window_params = [{transform_indices = @transform_0, window_bounds = array<i64: 16, 128>}, {pipeline_mode = #tpu.pipeline_mode<synchronous>, transform_indices = @transform_1, window_bounds = array<i64: 16, 1>}, {transform_indices = @transform_2, window_bounds = array<i64: 1>}, {transform_indices = @transform_3, window_bounds = array<i64: 1, 128>}]} {
    %c0 = arith.constant 0 : index
    %c0_0 = arith.constant 0 : index
    %0 = vector.load %arg1[%c0, %c0_0] : memref<16x128xf32, #tpu.memory_space<vmem>>, vector<16x128xf32>
    %c0_1 = arith.constant 0 : index
    %c0_2 = arith.constant 0 : index
    %1 = vector.load %arg2[%c0_1, %c0_2] : memref<16x1xf32, #tpu.memory_space<vmem>>, vector<16x1xf32>
    %2 = vector.broadcast %1 : vector<16x1xf32> to vector<16x128xf32>
    %3 = arith.mulf %0, %2 : vector<16x128xf32>
    %cst = arith.constant dense<0.000000e+00> : vector<128xf32>
    %4 = vector.multi_reduction <add>, %3, %cst [0] : vector<16x128xf32> to vector<128xf32>
    %5 = vector.shape_cast %4 : vector<128xf32> to vector<1x128xf32>
    %c0_3 = arith.constant 0 : index
    %6 = memref.load %arg3[%c0_3] : memref<1xf32, #tpu.memory_space<smem>>
    %7 = vector.broadcast %6 : f32 to vector<1x128xf32>
    %8 = arith.addf %5, %7 : vector<1x128xf32>
    %cst_4 = arith.constant 0.000000e+00 : f32
    %9 = vector.broadcast %cst_4 : f32 to vector<1x128xf32>
    %10 = arith.subf %9, %8 : vector<1x128xf32>
    %11 = math.exp %10 : vector<1x128xf32>
    %cst_5 = arith.constant 1.000000e+00 : f32
    %12 = vector.broadcast %cst_5 : f32 to vector<1x128xf32>
    %13 = arith.addf %12, %11 : vector<1x128xf32>
    %cst_6 = arith.constant 1.000000e+00 : f32
    %14 = vector.broadcast %cst_6 : f32 to vector<1x128xf32>
    %15 = arith.divf %14, %13 : vector<1x128xf32>
    %c0_7 = arith.constant 0 : index
    %c0_8 = arith.constant 0 : index
    %16 = vector.load %arg4[%c0_7, %c0_8] : memref<1x128xf32, #tpu.memory_space<vmem>>, vector<1x128xf32>
    tpu.vector_store %arg4[%c0_7, %c0_8], %15 {strides = array<i32>} : memref<1x128xf32, #tpu.memory_space<vmem>>, vector<1x128xf32>,
    return
  }
  func.func @transform_0(%arg0: i32) -> (i32, i32) {
    %c0_i32 = arith.constant 0 : i32
    %c0_i32_0 = arith.constant 0 : i32
    return %c0_i32, %arg0 : i32, i32
  }
  func.func @transform_1(%arg0: i32) -> (i32, i32) {
    %c0_i32 = arith.constant 0 : i32
    %c0_i32_0 = arith.constant 0 : i32
    %c0_i32_1 = arith.constant 0 : i32
    return %c0_i32, %c0_i32_0 : i32, i32
  }
  func.func @transform_2(%arg0: i32) -> i32 {
    %c0_i32 = arith.constant 0 : i32
    %c0_i32_0 = arith.constant 0 : i32
    return %c0_i32 : i32
  }
  func.func @transform_3(%arg0: i32) -> (i32, i32) {
    %c0_i32 = arith.constant 0 : i32
    %c0_i32_0 = arith.constant 0 : i32
    return %c0_i32, %arg0 : i32, i32
  }
}

</mosaic_0001>

<llo_original>
// kernel: tpu_custom_call.1
$region0: #{tpu_custom_call.1}
  #allocation0 [shape = 'u32[]', space=smem, size = 0x4, offset = 0x4, fixed_abs, tag = 'smem constant byte address 0x4 - core index']
  #allocation1 [shape = 'u32[144,128]{1,0:T(1,128)}', space=vmem, size = 0x12000, scoped, tag = 'internal scratch']
  #allocation2 [shape = 'f32[1]{0:T(128)S(6)}', space=smem, size = 0x200, scoped, tag = 'scoped memory for tpu_custom_call.1']
  %s0 = inlined_call_operand.vmem [shape: f32[16,128], index: 0, kind: input, shape index: {}]
  %s1 = inlined_call_operand.vmem [shape: f32[16,1], index: 1, kind: input, shape index: {}]
  %s2 = inlined_call_operand.<no memory space> [shape: f32[1], index: 2, kind: input, shape index: {}]
  %s3 = inlined_call_operand.hbm [shape: f32[1,128], index: 3, kind: output, shape index: {}]
  %s4 = sld [smem:[#allocation0]]
  $region22: #{tpu_custom_call.1} parent=0
    _
  %s6 = ssub.s32 1, %s4
  %s7 = scalar_select 0, %s6, %s4
  %8 = sst [smem:[#allocation2]] %s2
  $region1: #{tpu_custom_call.1} parent=0
    #allocation3 [shape = 'u8[512]{0}', space=vmem, size = 0x400, scoped, tag = 'output window, operand 0, single buffered']
    #allocation4 [shape = 's32[1]{0}', space=sflag, size = 0x4, scoped, tag = 'scoped memory for tpu_custom_call.1']
    %9 = vsyncpa [#allocation4], 0
    // Predicated region
    $region2: #{tpu_custom_call.1} parent=1 // pred_check
      _
    $region3: #{tpu_custom_call.1} parent=1 // pred_check_branch
      %11 = sbr.rel (0) target = $region5
    $region4: #{tpu_custom_call.1} parent=1 // pred_region
      _
    $region5: #{tpu_custom_call.1} parent=1 // pred_fallthru
      _
    // Predicated region
    $region6: #{tpu_custom_call.1} parent=1 // pred_check
      _
    $region7: #{tpu_custom_call.1} parent=1 // pred_check_branch
      %13 = sbr.rel (0) target = $region9
    $region8: #{tpu_custom_call.1} parent=1 // pred_region
      _
    $region9: #{tpu_custom_call.1} parent=1 // pred_fallthru
      _
    // Predicated region
    $region10: #{tpu_custom_call.1} parent=1 // pred_check
      _
    $region11: #{tpu_custom_call.1} parent=1 // pred_check_branch
      %15 = sbr.rel (0) target = $region13
    $region12: #{tpu_custom_call.1} parent=1 // pred_region
      _
    $region13: #{tpu_custom_call.1} parent=1 // pred_fallthru
      _
    %v16 = vld [vmem:[%s0] sm:$0xff]
    %v17 = vld [vmem:[%s0 + $0x8] sm:$0xff]
    %v18 = vld [vmem:[%s1] sm:$0xff]
    %v19 = vld [vmem:[%s1 + $0x8] sm:$0xff]
    %21 = vset.pattern.permute.xlu0 0
    %22 = vperm.xlu0 %21, %v18
    %v23 = vpop.permute.xlu0 %22
    %26 = vset.pattern.permute.xlu0 0
    %27 = vperm.xlu0 %26, %v19
    %v28 = vpop.permute.xlu0 %27
    %v30 = vmul.f32 %v16, %v23
    %v31 = vmul.f32 %v17, %v28
    %v32 = vadd.f32 %v30, %v31
    %v33 = vrot.slane %v32, 4
    %v34 = vadd.f32 %v32, %v33
    %v35 = vrot.slane %v34, 2
    %v36 = vadd.f32 %v34, %v35
    %v37 = vrot.slane %v36, 1
    %v38 = vadd.f32 %v36, %v37
    %s39 = sld [smem:[#allocation2]]
    %v40 = vstv %s39
    %v41 = vadd.f32 %v38, %v40
    %v42 = vsub.f32 0.0, %v41
    %v43 = vmul.f32 %v42, 1.442695
    %v44 = vpow.pop %v43
    %v45 = vadd.f32 %v44, 1.0
    %v46 = vrcp.pop %v45
    %v47 = vmul.f32 1.0, %v46
    %48 = vst [vmem:[#allocation3] sm:$0x1] %v47
    // Predicated region
    $region14: #{tpu_custom_call.1} parent=1 // pred_check
      _
    $region15: #{tpu_custom_call.1} parent=1 // pred_check_branch
      %50 = sbr.rel (0) target = $region17
    $region16: #{tpu_custom_call.1} parent=1 // pred_region
      %s52 = ssub.s32 16, 16
      %53 = vsyncadd [#allocation4], %s52
      %s55 = sshll.u32 [#allocation3], 4
      %s56 = int_to_ptr.vmem [resolvable:$true] %s55
      %58 = dma.vmem_to_hbm [thread:$0]  %s56, 16, %s3, [#allocation4]
    $region17: #{tpu_custom_call.1} parent=1 // pred_fallthru
      _
    // Predicated region
    $region18: #{tpu_custom_call.1} parent=1 // pred_check
      _
    $region19: #{tpu_custom_call.1} parent=1 // pred_check_branch
      %60 = sbr.rel (0) target = $region21
    $region20: #{tpu_custom_call.1} parent=1 // pred_region
      %61 = dma.done [#allocation4], 16
    $region21: #{tpu_custom_call.1} parent=1 // pred_fallthru
      _
    %62 = vsyncpa [#allocation4], 1

</llo_original>
